<compile_context>
chip_gen: v6e
topology: v6e:2x2x1
jax: 0.10.0
libtpu: 0.0.40
codegen_flags: <defaults>
</compile_context>

<pallas_src>
import math
import functools

import jax
import jax.numpy as jnp
from jax.experimental import pallas as pl
from jax.experimental.pallas import tpu as pltpu


# ---------------------------------------------------------------------------
# Kernel: out = x * sqrt(d_model) + pe   (pe broadcast over the batch rows)
# ---------------------------------------------------------------------------

def pos_enc_kernel(x_ref, pe_ref, o_ref, *, scale):
    # x_ref : (NB, TL)  -- NB batch rows, TL flattened (seq*d_model) lanes
    # pe_ref: (1,  TL)  -- shared across the batch, broadcast in-register
    o_ref[...] = x_ref[...] * scale + pe_ref[...]


# ---------------------------------------------------------------------------
# Tile pickers (respect the (8, 128) block constraint, cap VMEM footprint)
# ---------------------------------------------------------------------------

_LANE = 128
_SUBLANE = 8


def _pick_batch_tile(n, max_rows=64):
    """Sublane-axis tile: a multiple of 8 that divides n, else full extent."""
    if n <= _SUBLANE or n % _SUBLANE != 0:
        return n                      # full extent is always a legal block dim
    t = min(n, max_rows)
    t -= t % _SUBLANE
    while n % t != 0:
        t -= _SUBLANE
    return t


def _pick_lane_tile(L, nb, itemsize, tile_budget=2 << 20, want_multi=False):
    """Lane-axis tile: a multiple of 128 dividing L, sized so one x tile is
    about `tile_budget` bytes; falls back to full extent if L is unaligned."""
    if L % _LANE != 0:
        return L                      # sub-128-lane / unaligned fallback
    cap = max(_LANE, (tile_budget // max(nb * itemsize, 1)) // _LANE * _LANE)
    if want_multi:
        # keep >= 2 lane blocks so both v7x TensorCores get work
        cap = min(cap, max(_LANE, (L // 2) // _LANE * _LANE))
    t = max(_LANE, min(cap, L) // _LANE * _LANE)
    while L % t != 0:
        t -= _LANE
    return t


# ---------------------------------------------------------------------------
# Wrapper
# ---------------------------------------------------------------------------

def positional_encoding(x, pe):
    """out[n, s, :] = x[n, s, :] * sqrt(d_model) + pe[s, :]"""
    n, s, d = x.shape
    assert s <= pe.shape[0], "seq_len exceeds max_seq_len of the PE buffer"
    assert d == pe.shape[1], "d_model mismatch with the PE buffer"

    scale = float(math.sqrt(d))
    itemsize = jnp.dtype(x.dtype).itemsize

    # Flatten (seq, d_model) into one lane axis.  The op is purely
    # elementwise with pe broadcast over batch, so the 2-D view is exact and
    # keeps stores lane-dense even for d_model < 128.
    L = s * d
    x2 = x.reshape(n, L)
    pe2 = pe[:s].astype(x.dtype).reshape(1, L)

    total_bytes = n * L * itemsize
    nb = _pick_batch_tile(n)
    tL = _pick_lane_tile(L, nb, itemsize, want_multi=total_bytes > (4 << 20))

    # Double-buffered footprint: 2 x (x tile + out tile + pe tile).
    vmem_limit = 32 << 20
    footprint = 2 * (2 * nb * tL + tL) * itemsize
    if footprint > vmem_limit:
        # Only reachable for huge inputs whose seq*d_model is not 128-aligned.
        # TODO(synk): add a pad-and-mask path for large unaligned shapes.
        raise ValueError(
            f"tile footprint {footprint} B exceeds the {vmem_limit} B VMEM "
            f"limit; seq*d_model={L} is not 128-aligned and too large for "
            f"the full-extent fallback")

    grid = (pl.cdiv(L, tL), pl.cdiv(n, nb))   # batch is the innermost axis

    out2 = pl.pallas_call(
        functools.partial(pos_enc_kernel, scale=scale),
        out_shape=jax.ShapeDtypeStruct((n, L), x.dtype),
        grid=grid,
        in_specs=[
            # x: tiled over (batch rows, flattened seq*d_model lanes)
            pl.BlockSpec((nb, tL), lambda l, b: (b, l)),
            # pe: index_map ignores the (innermost, fastest-varying) batch
            # axis, so its block index is unchanged across the batch loop and
            # Pallas keeps it resident in VMEM instead of re-DMAing it per
            # batch block.
            pl.BlockSpec((1, tL), lambda l, b: (0, l)),
        ],
        out_specs=pl.BlockSpec((nb, tL), lambda l, b: (b, l)),
        compiler_params=pltpu.CompilerParams(
            dimension_semantics=("parallel", "parallel"),
            vmem_limit_bytes=vmem_limit,
        ),
        cost_estimate=pl.CostEstimate(
            flops=2 * n * s * d,
            bytes_accessed=(2 * n + 1) * s * d * itemsize,
            transcendentals=0,
        ),
    )(x2, pe2)

    return out2.reshape(n, s, d)


# ---------------------------------------------------------------------------
# PE buffer construction (matches the PyTorch register_buffer; fixed for
# odd d_model: the cos term uses only floor(d/2) frequencies)
# ---------------------------------------------------------------------------

def make_pe(d_model, max_seq_len):
    pos = jnp.arange(max_seq_len, dtype=jnp.float32)[:, None]
    div = jnp.exp(
        jnp.arange(0, d_model, 2, dtype=jnp.float32)
        * (-math.log(10000.0) / d_model)
    )
    pe = jnp.zeros((max_seq_len, d_model), jnp.float32)
    pe = pe.at[:, 0::2].set(jnp.sin(pos * div))
    pe = pe.at[:, 1::2].set(jnp.cos(pos * div[: d_model // 2]))
    return pe


def positional_encoding_ref(x, pe):
    n, s, d = x.shape
    return x * (d ** 0.5) + pe[None, :s, :].astype(x.dtype)


# ---------------------------------------------------------------------------
# Main
# ---------------------------------------------------------------------------

if __name__ == "__main__":
    key = jax.random.PRNGKey(0)
    k1, k2, k3 = jax.random.split(key, 3)

    # Case 1: small shapes consistent with the module (d_model < 128; the
    # flattened lane axis s*d = 256 keeps stores lane-dense anyway).
    d_model, max_seq_len = 32, 16
    batch, seq = 2, 8
    pe1 = make_pe(d_model, max_seq_len)
    x1 = jax.random.normal(k1, (batch, seq, d_model), jnp.float32)
    out1 = jax.block_until_ready(positional_encoding(x1, pe1))
    ref1 = positional_encoding_ref(x1, pe1)
    assert out1.shape == (batch, seq, d_model)
    assert bool(jnp.all(jnp.isfinite(out1)))
    assert bool(jnp.allclose(out1, ref1, rtol=1e-6, atol=1e-6))

    # Case 2: larger shapes exercising the multi-block pipelined path
    # (grid = (4, 1): four ~2 MiB lane tiles, whole batch on the sublane
    # axis, pe tile reused across the batch).
    d_model2, max_seq_len2, batch2, seq2 = 512, 1024, 4, 1024
    pe2 = make_pe(d_model2, max_seq_len2)
    x2 = jax.random.normal(k2, (batch2, seq2, d_model2), jnp.float32)
    out2 = jax.block_until_ready(positional_encoding(x2, pe2))
    ref2 = positional_encoding_ref(x2, pe2)
    assert out2.shape == (batch2, seq2, d_model2)
    assert bool(jnp.all(jnp.isfinite(out2)))
    assert bool(jnp.allclose(out2, ref2, rtol=1e-6, atol=1e-6))

    # Case 3: odd d_model (exercises the make_pe fix) and the non-128-aligned
    # full-extent fallback path.
    d_model3, max_seq_len3, batch3, seq3 = 7, 12, 3, 10
    pe3 = make_pe(d_model3, max_seq_len3)
    x3 = jax.random.normal(k3, (batch3, seq3, d_model3), jnp.float32)
    out3 = jax.block_until_ready(positional_encoding(x3, pe3))
    ref3 = positional_encoding_ref(x3, pe3)
    assert out3.shape == (batch3, seq3, d_model3)
    assert bool(jnp.allclose(out3, ref3, rtol=1e-6, atol=1e-6))

    print("KERNEL_OK")
</pallas_src>

<mosaic_0001>
module attributes {stable_mosaic.version = 11 : i64} {
  func.func @pos_enc_kernel(%arg0: i32, %arg1: i32, %arg2: memref<2x256xf32, #tpu.memory_space<vmem>>, %arg3: memref<1x256xf32, #tpu.memory_space<vmem>>, %arg4: memref<2x256xf32, #tpu.memory_space<vmem>>) attributes {dimension_semantics = [#tpu.dimension_semantics<parallel>, #tpu.dimension_semantics<parallel>], iteration_bounds = array<i64: 1, 1>, scalar_prefetch = 0 : i64, scratch_operands = 0 : i64, tpu.core_type = #tpu.core_type<tc>, window_params = [{transform_indices = @transform_0, window_bounds = array<i64: 2, 256>}, {transform_indices = @transform_1, window_bounds = array<i64: 1, 256>}, {transform_indices = @transform_2, window_bounds = array<i64: 2, 256>}]} {
    %c0 = arith.constant 0 : index
    %c0_0 = arith.constant 0 : index
    %0 = vector.load %arg2[%c0, %c0_0] : memref<2x256xf32, #tpu.memory_space<vmem>>, vector<2x256xf32>
    %cst = arith.constant 5.65685415 : f32
    %1 = vector.broadcast %cst : f32 to vector<2x256xf32>
    %2 = arith.mulf %0, %1 : vector<2x256xf32>
    %c0_1 = arith.constant 0 : index
    %c0_2 = arith.constant 0 : index
    %3 = vector.load %arg3[%c0_1, %c0_2] : memref<1x256xf32, #tpu.memory_space<vmem>>, vector<1x256xf32>
    %4 = vector.broadcast %3 : vector<1x256xf32> to vector<2x256xf32>
    %5 = arith.addf %2, %4 : vector<2x256xf32>
    %c0_3 = arith.constant 0 : index
    %c0_4 = arith.constant 0 : index
    %6 = vector.load %arg4[%c0_3, %c0_4] : memref<2x256xf32, #tpu.memory_space<vmem>>, vector<2x256xf32>
    tpu.vector_store %arg4[%c0_3, %c0_4], %5 {strides = array<i32>} : memref<2x256xf32, #tpu.memory_space<vmem>>, vector<2x256xf32>,
    return
  }
  func.func @transform_0(%arg0: i32, %arg1: i32) -> (i32, i32) {
    %c0_i32 = arith.constant 0 : i32
    return %arg1, %arg0 : i32, i32
  }
  func.func @transform_1(%arg0: i32, %arg1: i32) -> (i32, i32) {
    %c0_i32 = arith.constant 0 : i32
    %c0_i32_0 = arith.constant 0 : i32
    return %c0_i32, %arg0 : i32, i32
  }
  func.func @transform_2(%arg0: i32, %arg1: i32) -> (i32, i32) {
    %c0_i32 = arith.constant 0 : i32
    return %arg1, %arg0 : i32, i32
  }
}

</mosaic_0001>

<llo_original>
// kernel: tpu_custom_call.1
$region0: #{tpu_custom_call.1}
  #allocation0 [shape = 'u32[]', space=smem, size = 0x4, offset = 0x4, fixed_abs, tag = 'smem constant byte address 0x4 - core index']
  #allocation1 [shape = 'u32[144,128]{1,0:T(1,128)}', space=vmem, size = 0x12000, scoped, tag = 'internal scratch']
  %s0 = inlined_call_operand.hbm [shape: f32[2,256], index: 0, kind: input, shape index: {}]
  %s1 = inlined_call_operand.hbm [shape: f32[1,256], index: 1, kind: input, shape index: {}]
  %s2 = inlined_call_operand.hbm [shape: f32[2,256], index: 2, kind: output, shape index: {}]
  %s3 = sld [smem:[#allocation0]]
  $region26: #{tpu_custom_call.1} parent=0
    _
  %s5 = ssub.s32 1, %s3
  %s6 = scalar_select 0, %s5, %s3
  $region1: #{tpu_custom_call.1} parent=0
    #allocation2 [shape = 'u8[2048]{0}', space=vmem, size = 0x800, scoped, tag = 'input window, operand 0, single buffered']
    #allocation3 [shape = 's32[1]{0}', space=sflag, size = 0x4, scoped, tag = 'scoped memory for tpu_custom_call.1']
    #allocation4 [shape = 's32[1]{0}', space=sflag, size = 0x4, scoped, tag = 'scoped memory for tpu_custom_call.1']
    #allocation5 [shape = 'u8[1024]{0}', space=vmem, size = 0x400, scoped, tag = 'input window, operand 1, single buffered']
    #allocation6 [shape = 's32[1]{0}', space=sflag, size = 0x4, scoped, tag = 'scoped memory for tpu_custom_call.1']
    #allocation7 [shape = 'u8[2048]{0}', space=vmem, size = 0x800, scoped, tag = 'output window, operand 0, single buffered']
    %7 = vsyncpa [#allocation3], 0
    %8 = vsyncpa [#allocation6], 0
    %9 = vsyncpa [#allocation4], 0
    // Predicated region
    $region2: #{tpu_custom_call.1} parent=1 // pred_check
      _
    $region3: #{tpu_custom_call.1} parent=1 // pred_check_branch
      %11 = sbr.rel (0) target = $region5
    $region4: #{tpu_custom_call.1} parent=1 // pred_region
      %s13 = ssub.s32 64, 64
      %14 = vsyncadd [#allocation3], %s13
      %s16 = sshll.u32 [#allocation2], 4
      %s17 = int_to_ptr.vmem [resolvable:$true] %s16
      %19 = dma.hbm_to_vmem [thread:$0]  %s0, 64, %s17, [#allocation3]
    $region5: #{tpu_custom_call.1} parent=1 // pred_fallthru
      _
    // Predicated region
    $region6: #{tpu_custom_call.1} parent=1 // pred_check
      _
    $region7: #{tpu_custom_call.1} parent=1 // pred_check_branch
      %21 = sbr.rel (0) target = $region9
    $region8: #{tpu_custom_call.1} parent=1 // pred_region
      %s23 = ssub.s32 32, 32
      %24 = vsyncadd [#allocation6], %s23
      %s26 = sshll.u32 [#allocation5], 4
      %s27 = int_to_ptr.vmem [resolvable:$true] %s26
      %29 = dma.hbm_to_vmem [thread:$0]  %s1, 32, %s27, [#allocation6]
    $region9: #{tpu_custom_call.1} parent=1 // pred_fallthru
      _
    // Predicated region
    $region10: #{tpu_custom_call.1} parent=1 // pred_check
      _
    $region11: #{tpu_custom_call.1} parent=1 // pred_check_branch
      %31 = sbr.rel (0) target = $region13
    $region12: #{tpu_custom_call.1} parent=1 // pred_region
      %32 = dma.done [#allocation3], 64
    $region13: #{tpu_custom_call.1} parent=1 // pred_fallthru
      _
    // Predicated region
    $region14: #{tpu_custom_call.1} parent=1 // pred_check
      _
    $region15: #{tpu_custom_call.1} parent=1 // pred_check_branch
      %34 = sbr.rel (0) target = $region17
    $region16: #{tpu_custom_call.1} parent=1 // pred_region
      %35 = dma.done [#allocation6], 32
    $region17: #{tpu_custom_call.1} parent=1 // pred_fallthru
      _
    %v36 = vld [vmem:[#allocation2] sm:$0xf]
    %v37 = vmul.f32 %v36, 5.656854
    %v38 = vld [vmem:[#allocation5] sm:$0x3]
    %v40 = vlaneseq
    %v41 = vshrl.u32 %v40, 7
    %v42 = vsub.s32 0, %v41
    %v43 = vrot.slane %v38, %v42
    %v44 = vlaneseq
    %v45 = vshrl.u32 %v44, 7
    %v46 = vsub.s32 1, %v45
    %v47 = vrot.slane %v38, %v46
    %v48 = vcombine.low %v43, %v47
    %v50 = vunpack.c.l.s4 1983009808
    %v51 = vunpack.c.0.s8 %v50
    %v52 = vlaneseq
    %v53 = vshrl.u32 %v52, 7
    %v54 = vsub.s32 %v51, %v53
    %v55 = vrot.slane %v48, %v54
    %v57 = vadd.f32 %v37, %v55
    %58 = vst [vmem:[#allocation7] sm:$0xf] %v57
    // Predicated region
    $region18: #{tpu_custom_call.1} parent=1 // pred_check
      _
    $region19: #{tpu_custom_call.1} parent=1 // pred_check_branch
      %60 = sbr.rel (0) target = $region21
    $region20: #{tpu_custom_call.1} parent=1 // pred_region
      %s62 = ssub.s32 64, 64
      %63 = vsyncadd [#allocation4], %s62
      %s65 = sshll.u32 [#allocation7], 4
      %s66 = int_to_ptr.vmem [resolvable:$true] %s65
      %68 = dma.vmem_to_hbm [thread:$0]  %s66, 64, %s2, [#allocation4]
    $region21: #{tpu_custom_call.1} parent=1 // pred_fallthru
      _
    // Predicated region
    $region22: #{tpu_custom_call.1} parent=1 // pred_check
      _
    $region23: #{tpu_custom_call.1} parent=1 // pred_check_branch
      %70 = sbr.rel (0) target = $region25
    $region24: #{tpu_custom_call.1} parent=1 // pred_region
      %71 = dma.done [#allocation4], 64
    $region25: #{tpu_custom_call.1} parent=1 // pred_fallthru
      _
    %72 = vsyncpa [#allocation3], 1
    %73 = vsyncpa [#allocation6], 1
    %74 = vsyncpa [#allocation4], 1

</llo_original>
